<compile_context>
chip_gen: v5e
topology: v5e:2x2
jax: 0.10.0
libtpu: 0.0.40
codegen_flags: <defaults>
</compile_context>

<pallas_src>
import math

import jax
import jax.numpy as jnp
from jax.experimental import pallas as pl
from jax.experimental.pallas import tpu as pltpu


def _drop_path_kernel(scale_ref, x_ref, o_ref):
    # scale_ref: (TB, 1) in x dtype; broadcast multiply along the lane axis.
    o_ref[...] = x_ref[...] * scale_ref[...]


def _drop_path_add_kernel(scale_ref, x_ref, res_ref, o_ref):
    # Fused residual add: o = residual + x * scale (saves one full HBM pass).
    o_ref[...] = res_ref[...] + x_ref[...] * scale_ref[...]


def _round_down(x, m):
    return (x // m) * m


_TARGET_TILE_BYTES = 4 * 1024 * 1024   # ~4 MiB: near-roofline on v6e/v7x, cheap on v5e
_VMEM_LIMIT_BYTES = 32 * 1024 * 1024   # raise v5e's 16 MiB scoped default; <= v7x physical


def _choose_tiles(B, N, itemsize, target_bytes=_TARGET_TILE_BYTES):
    """Dense (TB, TN) tiles: lane/sublane aligned, sized *jointly* to ~target_bytes."""
    sublane = {4: 8, 2: 16, 1: 32}.get(itemsize, 8)

    # Lane (last) dim first: multiple of 128 (or the full dim), capped so a
    # single sublane group already fits the byte budget.
    if N < 128:
        TN = N                                            # full array dim: always legal
    else:
        max_lanes = max(128, _round_down(target_bytes // (sublane * itemsize), 128))
        n_aligned = N if N % 128 == 0 else _round_down(N, 128)   # ragged tail masked
        TN = min(n_aligned, max_lanes)

    # Sublane dim: grow in sublane multiples until TB*TN*itemsize ~= target_bytes.
    rows = max(1, target_bytes // max(1, TN * itemsize))
    rows = max(sublane, _round_down(rows, sublane))
    TB = min(B, rows)   # either == B (full dim, legal) or a sublane multiple (legal,
                        # ragged last B-block is masked by Pallas)
    return TB, TN


def _pallas_drop_path(scale, x2d, residual2d=None):
    B, N = x2d.shape
    itemsize = jnp.dtype(x2d.dtype).itemsize
    TB, TN = _choose_tiles(B, N, itemsize)

    # Long (N-tile) axis first so the v7x two-core split lands on it.
    grid = (pl.cdiv(N, TN), pl.cdiv(B, TB))

    data_spec = pl.BlockSpec((TB, TN), lambda j, i: (i, j))
    scale_spec = pl.BlockSpec((TB, 1), lambda j, i: (i, 0))

    if residual2d is None:
        kernel = _drop_path_kernel
        in_specs = [scale_spec, data_spec]
        operands = (scale, x2d)
    else:
        kernel = _drop_path_add_kernel
        in_specs = [scale_spec, data_spec, data_spec]
        operands = (scale, x2d, residual2d)

    return pl.pallas_call(
        kernel,
        out_shape=jax.ShapeDtypeStruct((B, N), x2d.dtype),
        grid_spec=pltpu.PrefetchScalarGridSpec(
            num_scalar_prefetch=0,
            grid=grid,
            in_specs=in_specs,
            out_specs=data_spec,
        ),
        compiler_params=pltpu.CompilerParams(
            dimension_semantics=("parallel", "parallel"),
            vmem_limit_bytes=_VMEM_LIMIT_BYTES,
        ),
        # NOTE: input_output_aliases could avoid a second HBM buffer for x, but
        # DropPath's input is usually still live (residual path), so no alias.
    )(*operands)


def _make_scale(rand, keep_prob, B, dtype):
    # 0.0 for dropped samples, 1/keep_prob for kept ones. Computed in f32 then
    # cast once to x dtype (mask is exactly 0/1, so the cast only rounds the
    # 1/keep_prob value, matching PyTorch's native-dtype division semantics).
    rand_f32 = rand.astype(jnp.float32)
    return (jnp.floor(keep_prob + rand_f32) / keep_prob).astype(dtype).reshape(B, 1)


def drop_path_pallas(x, rand, drop_prob: float = 0.0, training: bool = False):
    """x: (B, ...) array; rand: (B,) uniform [0,1) samples (any float dtype)."""
    if drop_prob == 0.0 or not training:
        return x
    keep_prob = 1.0 - drop_prob
    B = x.shape[0]
    N = math.prod(x.shape[1:])
    scale = _make_scale(rand, keep_prob, B, x.dtype)
    out2d = _pallas_drop_path(scale, x.reshape(B, N))
    return out2d.reshape(x.shape)


def drop_path_add_pallas(residual, x, rand, drop_prob: float = 0.0,
                         training: bool = False):
    """Fused `residual + drop_path(x)` — one HBM pass instead of two."""
    if drop_prob == 0.0 or not training:
        return residual + x
    keep_prob = 1.0 - drop_prob
    B = x.shape[0]
    N = math.prod(x.shape[1:])
    scale = _make_scale(rand, keep_prob, B, x.dtype)
    out2d = _pallas_drop_path(scale, x.reshape(B, N), residual.reshape(B, N))
    return out2d.reshape(x.shape)


class DropPath:
    """Mirror of the PyTorch DropPath module (forward only)."""

    def __init__(self, drop_prob=None):
        self.drop_prob = drop_prob
        self.training = True

    def __call__(self, x, rng_key):
        if self.drop_prob in (None, 0.0) or not self.training:
            return x
        # Per-sample uniforms are tiny glue; generate in f32 regardless of x dtype.
        rand = jax.random.uniform(rng_key, (x.shape[0],), dtype=jnp.float32)
        return drop_path_pallas(x, rand, float(self.drop_prob), self.training)


if __name__ == "__main__":
    key = jax.random.PRNGKey(0)
    kx, kr, kres = jax.random.split(key, 3)

    B, C, H, W = 2, 4, 16, 16
    x = jax.random.normal(kx, (B, C, H, W), dtype=jnp.float32)
    residual = jax.random.normal(kres, (B, C, H, W), dtype=jnp.float32)

    drop_prob = 0.2
    keep_prob = 1.0 - drop_prob
    rand = jax.random.uniform(kr, (B,), dtype=jnp.float32)

    # training=True path exercises the kernel
    out = drop_path_pallas(x, rand, drop_prob=drop_prob, training=True)
    out = jax.block_until_ready(out)

    # reference (pure JAX) sanity check
    mask = jnp.floor(keep_prob + rand).reshape(B, 1, 1, 1)
    ref = x / keep_prob * mask
    assert jnp.allclose(out, ref, rtol=1e-5, atol=1e-6), "mismatch vs reference"

    # fused residual variant
    out_fused = drop_path_add_pallas(residual, x, rand, drop_prob=drop_prob,
                                     training=True)
    out_fused = jax.block_until_ready(out_fused)
    assert jnp.allclose(out_fused, residual + ref, rtol=1e-5, atol=1e-5), \
        "fused mismatch vs reference"

    # eval / zero-prob path is identity
    out_eval = drop_path_pallas(x, rand, drop_prob=drop_prob, training=False)
    assert jnp.array_equal(out_eval, x)

    print("KERNEL_OK")
</pallas_src>

<mosaic_0001>
module attributes {stable_mosaic.version = 11 : i64} {
  func.func @_drop_path_kernel(%arg0: i32, %arg1: i32, %arg2: memref<2x1xf32, #tpu.memory_space<vmem>>, %arg3: memref<2x1024xf32, #tpu.memory_space<vmem>>, %arg4: memref<2x1024xf32, #tpu.memory_space<vmem>>) attributes {dimension_semantics = [#tpu.dimension_semantics<parallel>, #tpu.dimension_semantics<parallel>], iteration_bounds = array<i64: 1, 1>, scalar_prefetch = 0 : i64, scratch_operands = 0 : i64, tpu.core_type = #tpu.core_type<tc>, window_params = [{transform_indices = @transform_0, window_bounds = array<i64: 2, 1>}, {transform_indices = @transform_1, window_bounds = array<i64: 2, 1024>}, {transform_indices = @transform_2, window_bounds = array<i64: 2, 1024>}]} {
    %c0 = arith.constant 0 : index
    %c0_0 = arith.constant 0 : index
    %0 = vector.load %arg3[%c0, %c0_0] : memref<2x1024xf32, #tpu.memory_space<vmem>>, vector<2x1024xf32>
    %c0_1 = arith.constant 0 : index
    %c0_2 = arith.constant 0 : index
    %1 = vector.load %arg2[%c0_1, %c0_2] : memref<2x1xf32, #tpu.memory_space<vmem>>, vector<2x1xf32>
    %2 = vector.broadcast %1 : vector<2x1xf32> to vector<2x1024xf32>
    %3 = arith.mulf %0, %2 : vector<2x1024xf32>
    %c0_3 = arith.constant 0 : index
    %c0_4 = arith.constant 0 : index
    %4 = vector.load %arg4[%c0_3, %c0_4] : memref<2x1024xf32, #tpu.memory_space<vmem>>, vector<2x1024xf32>
    tpu.vector_store %arg4[%c0_3, %c0_4], %3 {strides = array<i32>} : memref<2x1024xf32, #tpu.memory_space<vmem>>, vector<2x1024xf32>,
    return
  }
  func.func @transform_0(%arg0: i32, %arg1: i32) -> (i32, i32) {
    %c0_i32 = arith.constant 0 : i32
    %c0_i32_0 = arith.constant 0 : i32
    return %arg1, %c0_i32 : i32, i32
  }
  func.func @transform_1(%arg0: i32, %arg1: i32) -> (i32, i32) {
    %c0_i32 = arith.constant 0 : i32
    return %arg1, %arg0 : i32, i32
  }
  func.func @transform_2(%arg0: i32, %arg1: i32) -> (i32, i32) {
    %c0_i32 = arith.constant 0 : i32
    return %arg1, %arg0 : i32, i32
  }
}

</mosaic_0001>

<llo_original>
// kernel: tpu_custom_call.1
$region0: #{tpu_custom_call.1}
  #allocation0 [shape = 'u32[]', space=smem, size = 0x4, offset = 0x4, fixed_abs, tag = 'smem constant byte address 0x4 - core index']
  #allocation1 [shape = 'u32[72,128]{1,0:T(1,128)}', space=vmem, size = 0x9000, scoped, tag = 'internal scratch']
  %s0 = inlined_call_operand.vmem [shape: f32[2,1], index: 0, kind: input, shape index: {}]
  %s1 = inlined_call_operand.hbm [shape: f32[2,1024], index: 1, kind: input, shape index: {}]
  %s2 = inlined_call_operand.hbm [shape: f32[2,1024], index: 2, kind: output, shape index: {}]
  %s3 = sld [smem:[#allocation0]]
  $region22: #{tpu_custom_call.1} parent=0
    _
  %s5 = ssub.s32 1, %s3
  %s6 = scalar_select 0, %s5, %s3
  $region1: #{tpu_custom_call.1} parent=0
    #allocation2 [shape = 'u8[8192]{0}', space=vmem, size = 0x2000, scoped, tag = 'input window, operand 1, single buffered']
    #allocation3 [shape = 's32[1]{0}', space=sflag, size = 0x4, scoped, tag = 'scoped memory for tpu_custom_call.1']
    #allocation4 [shape = 's32[1]{0}', space=sflag, size = 0x4, scoped, tag = 'scoped memory for tpu_custom_call.1']
    #allocation5 [shape = 'u8[8192]{0}', space=vmem, size = 0x2000, scoped, tag = 'output window, operand 0, single buffered']
    %7 = vsyncpa [#allocation3], 0
    %8 = vsyncpa [#allocation4], 0
    // Predicated region
    $region2: #{tpu_custom_call.1} parent=1 // pred_check
      _
    $region3: #{tpu_custom_call.1} parent=1 // pred_check_branch
      %10 = sbr.rel (0) target = $region5
    $region4: #{tpu_custom_call.1} parent=1 // pred_region
      _
    $region5: #{tpu_custom_call.1} parent=1 // pred_fallthru
      _
    // Predicated region
    $region6: #{tpu_custom_call.1} parent=1 // pred_check
      _
    $region7: #{tpu_custom_call.1} parent=1 // pred_check_branch
      %12 = sbr.rel (0) target = $region9
    $region8: #{tpu_custom_call.1} parent=1 // pred_region
      %14 = vsyncadd [#allocation3], 0
      %s16 = sshll.u32 %s1, 4
      %s17 = int_to_ptr.hbm [resolvable:$true] %s16
      %s18 = sshll.u32 [#allocation2], 4
      %s19 = int_to_ptr.vmem [resolvable:$true] %s18
      %21 = dma.hbm_to_vmem [thread:$0]  %s17, 256, %s19, [#allocation3]
    $region9: #{tpu_custom_call.1} parent=1 // pred_fallthru
      _
    // Predicated region
    $region10: #{tpu_custom_call.1} parent=1 // pred_check
      _
    $region11: #{tpu_custom_call.1} parent=1 // pred_check_branch
      %23 = sbr.rel (0) target = $region13
    $region12: #{tpu_custom_call.1} parent=1 // pred_region
      %25 = dma.done [#allocation3], 256
    $region13: #{tpu_custom_call.1} parent=1 // pred_fallthru
      _
    %v26 = vld [vmem:[#allocation2] sm:$0xff]
    %v27 = vld [vmem:[#allocation2 + $0x8] sm:$0xff]
    %v28 = vld [vmem:[%s0] sm:$0x3]
    %30 = vset.pattern.permute.xlu0 0
    %31 = vperm.xlu0 %30, %v28
    %v32 = vpop.permute.xlu0 %31
    %v34 = vunpack.c.l.s4 269488144
    %v35 = vunpack.c.0.s8 %v34
    %v36 = vperm.slane %v32, %v35
    %v38 = vmul.f32 %v26, %v36
    %v39 = vmul.f32 %v27, %v36
    %40 = vst [vmem:[#allocation5] sm:$0xff] %v38
    %41 = vst [vmem:[#allocation5 + $0x8] sm:$0xff] %v39
    // Predicated region
    $region14: #{tpu_custom_call.1} parent=1 // pred_check
      _
    $region15: #{tpu_custom_call.1} parent=1 // pred_check_branch
      %43 = sbr.rel (0) target = $region17
    $region16: #{tpu_custom_call.1} parent=1 // pred_region
      %45 = vsyncadd [#allocation4], 0
      %s47 = sshll.u32 [#allocation5], 4
      %s48 = int_to_ptr.vmem [resolvable:$true] %s47
      %s49 = sshll.u32 %s2, 4
      %s50 = int_to_ptr.hbm [resolvable:$true] %s49
      %52 = dma.vmem_to_hbm [thread:$0]  %s48, 256, %s50, [#allocation4]
    $region17: #{tpu_custom_call.1} parent=1 // pred_fallthru
      _
    // Predicated region
    $region18: #{tpu_custom_call.1} parent=1 // pred_check
      _
    $region19: #{tpu_custom_call.1} parent=1 // pred_check_branch
      %54 = sbr.rel (0) target = $region21
    $region20: #{tpu_custom_call.1} parent=1 // pred_region
      %56 = dma.done [#allocation4], 256
    $region21: #{tpu_custom_call.1} parent=1 // pred_fallthru
      _
    %57 = vsyncpa [#allocation3], 1
    %58 = vsyncpa [#allocation4], 1

</llo_original>
